<compile_context>
chip_gen: v7x
topology: tpu7x:2x2x1
jax: 0.10.0
libtpu: 0.0.40
codegen_flags: <defaults>
</compile_context>

<pallas_src>
import jax
import jax.numpy as jnp
from jax.experimental import pallas as pl
from jax.experimental.pallas import tpu as pltpu


def _headwise_kernel(x_ref, w_ref, o_ref):
    # x_ref: (tm, R_total)   w_ref: (R_total, N_out)   o_ref: (tm, N_out)
    o_ref[...] = jnp.dot(
        x_ref[...], w_ref[...], preferred_element_type=jnp.float32
    ).astype(o_ref.dtype)


def _round_up(x, m):
    return (x + m - 1) // m * m


def _sublane_multiple(dtype):
    # Sub-32-bit dtypes pack along sublanes: keep row tiles a multiple of the
    # packed sublane count (8 for f32, 16 for bf16, 32 for int8/fp8).
    return max(8, 32 // jnp.dtype(dtype).itemsize)


def build_reconstruction_weight(U, ranks):
    """Block-diagonal W (R_total x G*group_dim) such that x @ W == forward(x)."""
    group_dim, R_total = U.shape
    G = len(ranks)
    W = jnp.zeros((R_total, G * group_dim), U.dtype)
    off = 0
    for g, r in enumerate(ranks):
        W = W.at[off:off + r, g * group_dim:(g + 1) * group_dim].set(
            U[:, off:off + r].T)
        off += r
    return W


def headwise_lowrank_forward(hidden_states, U, ranks, *, tm=512):
    """Pallas equivalent of HeadwiseLowRankModule.forward.

    hidden_states: (B, S, sum(ranks))   -- latent, sliced per group by ranks
    U:             (group_dim, sum(ranks))
    returns:       (B, S, group_dim * len(ranks))
    """
    B, S, R_total = hidden_states.shape
    assert R_total == sum(ranks), "last dim must equal sum(ranks)"
    G = len(ranks)
    group_dim = U.shape[0]
    N_out = G * group_dim
    M = B * S

    W = build_reconstruction_weight(U, ranks)
    x2d = hidden_states.reshape(M, R_total)

    x_itemsize = jnp.dtype(hidden_states.dtype).itemsize
    w_itemsize = jnp.dtype(U.dtype).itemsize
    sub = _sublane_multiple(hidden_states.dtype)

    # Row tile: as big as a conservative VMEM budget allows (double-buffered
    # input and output tiles plus the resident weight), rounded to the sublane
    # multiple and clamped to the (padded) problem size.
    vmem_budget = 16 * 1024 * 1024  # well under the default scoped VMEM limit
    w_bytes = W.size * w_itemsize
    per_row_bytes = 2 * R_total * x_itemsize + 2 * N_out * x_itemsize
    tm_cap = max(sub, (vmem_budget - w_bytes) // max(per_row_bytes, 1))
    tm = max(sub, min(tm, tm_cap, _round_up(M, sub)))
    tm = _round_up(tm, sub)

    M_pad = _round_up(M, tm)
    if M_pad != M:
        # Pad rows so the grid divides exactly; padded rows are sliced off below.
        x2d = jnp.pad(x2d, ((0, M_pad - M), (0, 0)))

    cost = pl.CostEstimate(
        flops=2 * M_pad * R_total * N_out,
        transcendentals=0,
        bytes_accessed=(x2d.size * x_itemsize
                        + w_bytes
                        + M_pad * N_out * x_itemsize),
    )

    out = pl.pallas_call(
        _headwise_kernel,
        out_shape=jax.ShapeDtypeStruct((M_pad, N_out), hidden_states.dtype),
        grid_spec=pltpu.PrefetchScalarGridSpec(
            num_scalar_prefetch=0,
            grid=(M_pad // tm,),
            in_specs=[
                # Lane-dense full-width rows of x, streamed per tile.
                pl.BlockSpec((tm, R_total), lambda m: (m, 0)),
                # Whole weight, same block every step -> stays resident in VMEM.
                pl.BlockSpec((R_total, N_out), lambda m: (0, 0)),
            ],
            # Output written directly in its final (M, out_features) layout
            # (no post-kernel transpose/concat).
            out_specs=pl.BlockSpec((tm, N_out), lambda m: (m, 0)),
        ),
        compiler_params=pltpu.CompilerParams(
            dimension_semantics=("parallel",)),
        cost_estimate=cost,
    )(x2d, W)

    return out[:M].reshape(B, S, N_out)


def headwise_lowrank_reference(hidden_states, U, ranks):
    """Pure-JAX reference mirroring the PyTorch per-group loop."""
    outs = []
    off = 0
    for r in ranks:
        outs.append(hidden_states[:, :, off:off + r] @ U[:, off:off + r].T)
        off += r
    return jnp.concatenate(outs, axis=-1)


if __name__ == "__main__":
    key = jax.random.PRNGKey(0)

    # Module config (small; exercises unequal ranks and the row-padding path):
    ranks = [4, 6, 8, 6]        # per-head latent ranks
    in_features = 32            # only used by VT / project_to_latent (not in forward)
    out_features = 64
    G = len(ranks)
    group_dim = out_features // G   # 16
    B, S = 2, 8

    k_u, k_vt, k_x = jax.random.split(key, 3)
    U = jax.random.normal(k_u, (group_dim, sum(ranks)), jnp.float32) * 0.1
    VT_weight = jax.random.normal(k_vt, (sum(ranks), in_features), jnp.float32) * 0.1
    # TODO(synk): VT / project_to_latent is not part of forward(); VT_weight is unused here.

    # forward() slices the last dim by ranks, so its input is the latent (B, S, sum(ranks)).
    hidden_states = jax.random.normal(k_x, (B, S, sum(ranks)), jnp.float32)

    out = headwise_lowrank_forward(hidden_states, U, ranks)
    out = jax.block_until_ready(out)

    ref = headwise_lowrank_reference(hidden_states, U, ranks)
    assert out.shape == (B, S, out_features), out.shape
    assert jnp.allclose(out, ref, atol=1e-5, rtol=1e-5)
    print("KERNEL_OK")
</pallas_src>

<mosaic_0001>
module attributes {stable_mosaic.version = 11 : i64} {
  func.func @_headwise_kernel(%arg0: i32, %arg1: memref<16x24xf32, #tpu.memory_space<vmem>>, %arg2: memref<24x64xf32, #tpu.memory_space<vmem>>, %arg3: memref<16x64xf32, #tpu.memory_space<vmem>>) attributes {dimension_semantics = [#tpu.dimension_semantics<parallel>], iteration_bounds = array<i64: 1>, scalar_prefetch = 0 : i64, scratch_operands = 0 : i64, tpu.core_type = #tpu.core_type<tc>, window_params = [{transform_indices = @transform_0, window_bounds = array<i64: 16, 24>}, {pipeline_mode = #tpu.pipeline_mode<synchronous>, transform_indices = @transform_1, window_bounds = array<i64: 24, 64>}, {transform_indices = @transform_2, window_bounds = array<i64: 16, 64>}]} {
    %c0 = arith.constant 0 : index
    %c0_0 = arith.constant 0 : index
    %0 = vector.load %arg1[%c0, %c0_0] : memref<16x24xf32, #tpu.memory_space<vmem>>, vector<16x24xf32>
    %c0_1 = arith.constant 0 : index
    %c0_2 = arith.constant 0 : index
    %1 = vector.load %arg2[%c0_1, %c0_2] : memref<24x64xf32, #tpu.memory_space<vmem>>, vector<24x64xf32>
    %cst = arith.constant dense<0.000000e+00> : vector<16x64xf32>
    %2 = tpu.matmul %0, %1, %cst {dimension_numbers = #tpu.dot_dimension_numbers<[1], [0], [0], [1], [0, 0, 1, 1], [], []>} : vector<16x24xf32>, vector<24x64xf32>, vector<16x64xf32> -> vector<16x64xf32>
    %c0_3 = arith.constant 0 : index
    %c0_4 = arith.constant 0 : index
    %3 = vector.load %arg3[%c0_3, %c0_4] : memref<16x64xf32, #tpu.memory_space<vmem>>, vector<16x64xf32>
    tpu.vector_store %arg3[%c0_3, %c0_4], %2 {strides = array<i32>} : memref<16x64xf32, #tpu.memory_space<vmem>>, vector<16x64xf32>,
    return
  }
  func.func @transform_0(%arg0: i32) -> (i32, i32) {
    %c0_i32 = arith.constant 0 : i32
    %c0_i32_0 = arith.constant 0 : i32
    return %arg0, %c0_i32 : i32, i32
  }
  func.func @transform_1(%arg0: i32) -> (i32, i32) {
    %c0_i32 = arith.constant 0 : i32
    %c0_i32_0 = arith.constant 0 : i32
    %c0_i32_1 = arith.constant 0 : i32
    return %c0_i32, %c0_i32_0 : i32, i32
  }
  func.func @transform_2(%arg0: i32) -> (i32, i32) {
    %c0_i32 = arith.constant 0 : i32
    %c0_i32_0 = arith.constant 0 : i32
    return %arg0, %c0_i32 : i32, i32
  }
}

</mosaic_0001>

<llo_original>
// kernel: tpu_custom_call.1
$region0: #{tpu_custom_call.1}
  #allocation0 [shape = 'u32[]', space=smem, size = 0x4, offset = 0x4, fixed_abs, tag = 'smem constant byte address 0x4 - core index']
  #allocation1 [shape = 'u32[144,128]{1,0:T(1,128)}', space=vmem, size = 0x12000, scoped, tag = 'internal scratch']
  %s0 = inlined_call_operand.hbm [shape: f32[16,24], index: 0, kind: input, shape index: {}]
  %s1 = inlined_call_operand.hbm [shape: f32[24,64], index: 1, kind: input, shape index: {}]
  %s2 = inlined_call_operand.hbm [shape: f32[16,64], index: 2, kind: output, shape index: {}]
  %s3 = sld [smem:[#allocation0]]
  $region26: #{tpu_custom_call.1} parent=0
    _
  %s5 = ssub.s32 1, %s3
  %s6 = scalar_select 0, %s5, %s3
  $region1: #{tpu_custom_call.1} parent=0
    #allocation2 [shape = 'u8[8192]{0}', space=vmem, size = 0x2000, scoped, tag = 'input window, operand 0, single buffered']
    #allocation3 [shape = 's32[1]{0}', space=sflag, size = 0x4, scoped, tag = 'scoped memory for tpu_custom_call.1']
    #allocation4 [shape = 's32[1]{0}', space=sflag, size = 0x4, scoped, tag = 'scoped memory for tpu_custom_call.1']
    #allocation5 [shape = 'u8[12288]{0}', space=vmem, size = 0x3000, scoped, tag = 'input window, operand 1, single buffered']
    #allocation6 [shape = 's32[1]{0}', space=sflag, size = 0x4, scoped, tag = 'scoped memory for tpu_custom_call.1']
    #allocation7 [shape = 'u8[8192]{0}', space=vmem, size = 0x2000, scoped, tag = 'output window, operand 0, single buffered']
    %7 = vsyncpa [#allocation3], 0
    %8 = vsyncpa [#allocation6], 0
    %9 = vsyncpa [#allocation4], 0
    // Predicated region
    $region2: #{tpu_custom_call.1} parent=1 // pred_check
      _
    $region3: #{tpu_custom_call.1} parent=1 // pred_check_branch
      %11 = sbr.rel (0) target = $region5
    $region4: #{tpu_custom_call.1} parent=1 // pred_region
      %s13 = ssub.s32 256, 256
      %14 = vsyncadd [#allocation3], %s13
      %s15 = sshll.u32 [#allocation2], 4
      %s16 = int_to_ptr.vmem [resolvable:$true] %s15
      %21 = dma.hbm_to_vmem [thread:$0]  %s0, 256, %s16, [#allocation3], 128, 128, 8
    $region5: #{tpu_custom_call.1} parent=1 // pred_fallthru
      _
    // Predicated region
    $region6: #{tpu_custom_call.1} parent=1 // pred_check
      _
    $region7: #{tpu_custom_call.1} parent=1 // pred_check_branch
      %23 = sbr.rel (0) target = $region9
    $region8: #{tpu_custom_call.1} parent=1 // pred_region
      %s25 = ssub.s32 384, 384
      %26 = vsyncadd [#allocation6], %s25
      %s27 = sshll.u32 [#allocation5], 4
      %s28 = int_to_ptr.vmem [resolvable:$true] %s27
      %33 = dma.hbm_to_vmem [thread:$0]  %s1, 384, %s28, [#allocation6], 128, 128, 8
    $region9: #{tpu_custom_call.1} parent=1 // pred_fallthru
      _
    // Predicated region
    $region10: #{tpu_custom_call.1} parent=1 // pred_check
      _
    $region11: #{tpu_custom_call.1} parent=1 // pred_check_branch
      %35 = sbr.rel (0) target = $region13
    $region12: #{tpu_custom_call.1} parent=1 // pred_region
      %36 = dma.done [#allocation3], 256
    $region13: #{tpu_custom_call.1} parent=1 // pred_fallthru
      _
    // Predicated region
    $region14: #{tpu_custom_call.1} parent=1 // pred_check
      _
    $region15: #{tpu_custom_call.1} parent=1 // pred_check_branch
      %38 = sbr.rel (0) target = $region17
    $region16: #{tpu_custom_call.1} parent=1 // pred_region
      %39 = dma.done [#allocation6], 384
    $region17: #{tpu_custom_call.1} parent=1 // pred_fallthru
      _
    %v40 = vld [vmem:[#allocation2] sm:$0xff]
    %v41 = vld [vmem:[#allocation2 + $0x8] sm:$0xff]
    %v42 = vld [vmem:[#allocation5] sm:$0xff]
    %v43 = vld [vmem:[#allocation5 + $0x8] sm:$0xff]
    %v44 = vld [vmem:[#allocation5 + $0x10] sm:$0xff]
    %vm45 = vcmask 195584
    %v47 = vsel %vm45, %v40, 0
    %v50 = vsel %vm45, %v41, 0
    %52 = vmatprep.subr.mxu0 0.0
    %53 = vmatpush1.msra.mxu0 %v42
    %54 = vmatprep.subr.mxu0 0.0
    %55 = vmatpush1.msra.mxu0 %v43
    %56 = vmatprep.subr.mxu0 0.0
    %57 = vmatpush1.msra.mxu0 %v44
    %58 = vmatprep.subr.mxu0 0.0
    %59 = vmatpush1.msra.mxu0 0.0
    %60 = vmatprep.subr.mxu0 0.0
    %61 = vmatpush1.msra.mxu0 0.0
    %62 = vmatprep.subr.mxu0 0.0
    %63 = vmatpush1.msra.mxu0 0.0
    %64 = vmatprep.subr.mxu0 0.0
    %65 = vmatpush1.msra.mxu0 0.0
    %66 = vmatprep.subr.mxu0 0.0
    %67 = vmatpush1.msra.mxu0 0.0
    %68 = vmatprep.subr.mxu0 0.0
    %69 = vmatpush1.msra.mxu0 0.0
    %70 = vmatprep.subr.mxu0 0.0
    %71 = vmatpush1.msra.mxu0 0.0
    %72 = vmatprep.subr.mxu0 0.0
    %73 = vmatpush1.msra.mxu0 0.0
    %74 = vmatprep.subr.mxu0 0.0
    %75 = vmatpush1.msra.mxu0 0.0
    %76 = vmatprep.subr.mxu0 0.0
    %77 = vmatpush1.msra.mxu0 0.0
    %78 = vmatprep.subr.mxu0 0.0
    %79 = vmatpush1.msra.mxu0 0.0
    %80 = vmatprep.subr.mxu0 0.0
    %81 = vmatpush1.msra.mxu0 0.0
    %82 = vmatprep.subr.mxu0 0.0
    %83 = vmatpush1.msra.mxu0 0.0
    %84 = vmatprep.subr.mxu0 0.0
    %85 = vmatpush1.msra.mxu0 0.0
    %86 = vmatprep.subr.mxu0 0.0
    %87 = vmatpush1.msra.mxu0 0.0
    %88 = vmatprep.subr.mxu0 0.0
    %89 = vmatpush1.msra.mxu0 0.0
    %90 = vmatprep.subr.mxu0 0.0
    %91 = vmatpush1.msra.mxu0 0.0
    %92 = vmatprep.subr.mxu0 0.0
    %93 = vmatpush1.msra.mxu0 0.0
    %94 = vmatprep.subr.mxu0 0.0
    %95 = vmatpush1.msra.mxu0 0.0
    %96 = vmatprep.subr.mxu0 0.0
    %97 = vmatpush1.msra.mxu0 0.0
    %98 = vmatprep.subr.mxu0 0.0
    %99 = vmatpush1.msra.mxu0 0.0
    %100 = vmatprep.subr.mxu0 0.0
    %101 = vmatpush1.msra.mxu0 0.0
    %102 = vmatprep.subr.mxu0 0.0
    %103 = vmatpush1.msra.mxu0 0.0
    %104 = vmatprep.subr.mxu0 0.0
    %105 = vmatpush1.msra.mxu0 0.0
    %106 = vmatprep.subr.mxu0 0.0
    %107 = vmatpush1.msra.mxu0 0.0
    %108 = vmatprep.subr.mxu0 0.0
    %109 = vmatpush1.msra.mxu0 0.0
    %110 = vmatprep.subr.mxu0 0.0
    %111 = vmatpush1.msra.mxu0 0.0
    %112 = vmatprep.subr.mxu0 0.0
    %113 = vmatpush1.msra.mxu0 0.0
    %114 = vmatprep.subr.mxu0 0.0
    %115 = vmatpush1.msra.mxu0 0.0
    %116 = vmatprep.mubr.f32.mxu0 0.0
    %117 = vmatmul.mubr.f32.gmra.mrb[0].mxu0 %v47
    %v118 = vpop.f32.mrb[0].mxu0
    %v119 = vadd.f32 0.0, %v118
    %v120 = vpop.f32.mrb[0].mxu0
    %121 = vmatprep.mubr.f32.mxu0 0.0
    %122 = vmatmul.mubr.f32.gmra.mrb[0].mxu0 %v50
    %v123 = vpop.f32.mrb[0].mxu0
    %v124 = vadd.f32 0.0, %v123
    %v125 = vpop.f32.mrb[0].mxu0
    %126 = vdwg.mxu0
    %vm127 = vcmask 523264
    %128 = vst.msk [vmem:[#allocation7] sm:$0xff] %vm127, %v119
    %129 = vst.msk [vmem:[#allocation7 + $0x8] sm:$0xff] %vm127, %v124
    // Predicated region
    $region18: #{tpu_custom_call.1} parent=1 // pred_check
      _
    $region19: #{tpu_custom_call.1} parent=1 // pred_check_branch
      %131 = sbr.rel (0) target = $region21
    $region20: #{tpu_custom_call.1} parent=1 // pred_region
      %s133 = ssub.s32 256, 256
      %134 = vsyncadd [#allocation4], %s133
      %s135 = sshll.u32 [#allocation7], 4
      %s136 = int_to_ptr.vmem [resolvable:$true] %s135
      %141 = dma.vmem_to_hbm [thread:$0]  %s136, 256, %s2, [#allocation4], 128, 128, 8
    $region21: #{tpu_custom_call.1} parent=1 // pred_fallthru
      _
    // Predicated region
    $region22: #{tpu_custom_call.1} parent=1 // pred_check
      _
    $region23: #{tpu_custom_call.1} parent=1 // pred_check_branch
      %143 = sbr.rel (0) target = $region25
    $region24: #{tpu_custom_call.1} parent=1 // pred_region
      %144 = dma.done [#allocation4], 256
    $region25: #{tpu_custom_call.1} parent=1 // pred_fallthru
      _
    %145 = vsyncpa [#allocation3], 1
    %146 = vsyncpa [#allocation6], 1
    %147 = vsyncpa [#allocation4], 1

</llo_original>
